<compile_context>
chip_gen: v6e
topology: v6e:2x2x1
jax: 0.10.0
libtpu: 0.0.40
codegen_flags: <defaults>
</compile_context>

<pallas_src>
import jax
import jax.numpy as jnp
from jax.experimental import pallas as pl
from jax.experimental.pallas import tpu as pltpu


# Abramowitz & Stegun 4.4.45:  arccos(x) = sqrt(1-x) * P7(x),  0 <= x <= 1,
# |approximation error| <= 2e-8 (well below the f32 rounding of the mean).
_ACOS_COEFFS = (1.5707963050, -0.2145988016, 0.0889789874, -0.0501743046,
                0.0308918810, -0.0170881256, 0.0066700901, -0.0012624911)


def _acos_unit(x):
    """arccos for x in [0, 1] (float32): EUP sqrt + VALU Horner polynomial."""
    # TODO(synk): switch to jnp.arccos in-kernel if/when lax.acos (atan2-based)
    # gets a guaranteed Mosaic TPU lowering.
    c0, c1, c2, c3, c4, c5, c6, c7 = _ACOS_COEFFS
    p = c7
    for c in (c6, c5, c4, c3, c2, c1, c0):
        p = p * x + c
    return jnp.sqrt(jnp.maximum(1.0 - x, 0.0)) * p


def _round_up(n, m):
    return -(-n // m) * m


def _make_kernel(B, S, C, b_tile, tile_S, need_row_mask, need_col_mask):
    def kernel(pre_ref, lab_ref, out_ref):
        # Unrolled per-channel multiply-accumulate (C is tiny, e.g. 3): avoids
        # the cross-sublane reduce and full-block f32 upcast temporaries.
        acc = (pre_ref[:, 0, :].astype(jnp.float32)
               * lab_ref[:, 0, :].astype(jnp.float32))
        for c in range(1, C):
            acc += (pre_ref[:, c, :].astype(jnp.float32)
                    * lab_ref[:, c, :].astype(jnp.float32))

        # Faithful clamp(abs(inner), min=-1, max=1) (effectively [0, 1]).
        x = jnp.clip(jnp.abs(acc), -1.0, 1.0)

        if need_row_mask or need_col_mask:
            valid = None
            if need_row_mask:
                rows = (jax.lax.broadcasted_iota(jnp.int32, (b_tile, tile_S), 0)
                        + pl.program_id(0) * b_tile)
                valid = rows < B
            if need_col_mask:
                cols = (jax.lax.broadcasted_iota(jnp.int32, (b_tile, tile_S), 1)
                        + pl.program_id(1) * tile_S)
                cmask = cols < S
                valid = cmask if valid is None else (valid & cmask)
            # arccos(1) == 0, so padded lanes / out-of-range rows contribute 0
            # to the fused sum (also scrubs any NaN/Inf garbage in the padding).
            x = jnp.where(valid, x, 1.0)

        partial = jnp.sum(_acos_unit(x))

        sel = ((jax.lax.broadcasted_iota(jnp.int32, (8, 128), 0) == 0)
               & (jax.lax.broadcasted_iota(jnp.int32, (8, 128), 1) == 0))
        out_ref[...] = jnp.where(sel, partial, 0.0)

    return kernel


def cos_similarity_loss(ori_pre, ori_label):
    """Equivalent to CosSimilarityLoss()(ori_pre, ori_label)."""
    assert ori_pre.shape == ori_label.shape
    assert ori_pre.ndim >= 2
    B, C = ori_pre.shape[0], ori_pre.shape[1]
    S = 1
    for d in ori_pre.shape[2:]:
        S *= d

    pre3 = ori_pre.reshape(B, C, S)
    lab3 = ori_label.reshape(B, C, S)

    itemsize = jnp.dtype(ori_pre.dtype).itemsize
    sublane_pack = {4: 8, 2: 16, 1: 32}.get(itemsize, 8)
    c_pad = _round_up(C, sublane_pack)        # physical (sublane-padded) channels

    # ---- chip-aware VMEM budget, padded-C aware -----------------------------
    try:
        vmem_cap = int(pltpu.get_tpu_info().vmem_capacity_bytes)
    except Exception:
        vmem_cap = 64 * 1024 * 1024           # conservative (v7x-sized) fallback
    # One input block; x2 inputs x2 pipeline buffers ~= vmem_cap/4 of blocks,
    # leaving headroom for f32 temporaries and the tiny output buffers.
    block_budget = min(vmem_cap // 16, 8 * 1024 * 1024)
    vmem_limit = min(vmem_cap * 3 // 4, 100 * 1024 * 1024)

    unit_bytes = c_pad * 128 * itemsize       # one (row x 128-lane) VMEM slab
    budget_units = max(1, block_budget // unit_bytes)
    units_total = pl.cdiv(S, 128)

    b_tile = min(B, 8)
    if budget_units < b_tile:                 # pathological channel counts
        b_tile = max(1, budget_units)

    # Spend the budget on the lane axis first (lane-dense DMAs) ...
    tile_units = max(1, min(units_total, 256, budget_units // b_tile))
    # ... then on extra batch rows when the spatial extent alone is too small
    # to hide the ~0.35us per-grid-step overhead.
    if tile_units >= units_total and B > b_tile:
        b_tile = min(_round_up(B, 8),
                     max(8, (budget_units // units_total) // 8 * 8))
        tile_units = max(1, min(units_total, budget_units // b_tile))

    grid_b = pl.cdiv(B, b_tile)

    # Guarantee >=2 grid blocks so both v7x TensorCores get work
    # (harmless extra step on single-TC v5e/v6e).
    if grid_b == 1 and tile_units >= units_total and units_total > 1:
        tile_units = pl.cdiv(units_total, 2)

    tile_S = tile_units * 128
    grid_s = pl.cdiv(S, tile_S)

    need_row_mask = (B % b_tile) != 0
    need_col_mask = (S % tile_S) != 0

    kernel = _make_kernel(B=B, S=S, C=C, b_tile=b_tile, tile_S=tile_S,
                          need_row_mask=need_row_mask,
                          need_col_mask=need_col_mask)

    partials = pl.pallas_call(
        kernel,
        out_shape=jax.ShapeDtypeStruct((grid_b * 8, grid_s * 128), jnp.float32),
        grid=(grid_b, grid_s),
        in_specs=[
            pl.BlockSpec((b_tile, C, tile_S), lambda i, j: (i, 0, j)),
            pl.BlockSpec((b_tile, C, tile_S), lambda i, j: (i, 0, j)),
        ],
        out_specs=pl.BlockSpec((8, 128), lambda i, j: (i, j)),
        compiler_params=pltpu.CompilerParams(
            dimension_semantics=("parallel", "parallel"),
            vmem_limit_bytes=int(vmem_limit),
        ),
    )(pre3, lab3)

    # Finish the mean over the tiny per-step partial-sum array.
    return jnp.sum(partials) / (B * S)


def _cos_similarity_loss_ref(ori_pre, ori_label):
    d = jnp.sum(ori_pre.astype(jnp.float32) * ori_label.astype(jnp.float32), axis=1)
    d = jnp.clip(jnp.abs(d), -1.0, 1.0)
    return jnp.mean(jnp.arccos(d))


if __name__ == "__main__":
    key = jax.random.PRNGKey(0)
    k1, k2, k3, k4 = jax.random.split(key, 4)

    # Verify the in-kernel arccos approximation against jnp.arccos on [0, 1].
    xs = jnp.linspace(0.0, 1.0, 4097, dtype=jnp.float32)
    poly_err = float(jnp.max(jnp.abs(_acos_unit(xs) - jnp.arccos(xs))))
    assert poly_err < 5e-6, poly_err

    # Primary case: NCHW normal maps, dot over the channel axis.
    B, C, H, W = 2, 3, 16, 16
    pre = jax.random.normal(k1, (B, C, H, W), dtype=jnp.float32)
    lab = jax.random.normal(k2, (B, C, H, W), dtype=jnp.float32)
    # Unit-normalize along the channel axis so the dot is a true cosine.
    pre = pre / jnp.linalg.norm(pre, axis=1, keepdims=True)
    lab = lab / jnp.linalg.norm(lab, axis=1, keepdims=True)

    loss = jax.block_until_ready(cos_similarity_loss(pre, lab))
    ref = jax.block_until_ready(_cos_similarity_loss_ref(pre, lab))
    assert jnp.allclose(loss, ref, rtol=1e-5, atol=1e-5), (loss, ref)

    # Ragged case: B not a multiple of the batch tile and S not a multiple of
    # 128 -- exercises the in-kernel row/lane masking (no wrapper-side pad).
    B2, C2, H2, W2 = 11, 3, 10, 20
    pre2 = jax.random.normal(k3, (B2, C2, H2, W2), dtype=jnp.float32)
    lab2 = jax.random.normal(k4, (B2, C2, H2, W2), dtype=jnp.float32)
    pre2 = pre2 / jnp.linalg.norm(pre2, axis=1, keepdims=True)
    lab2 = lab2 / jnp.linalg.norm(lab2, axis=1, keepdims=True)

    loss2 = jax.block_until_ready(cos_similarity_loss(pre2, lab2))
    ref2 = jax.block_until_ready(_cos_similarity_loss_ref(pre2, lab2))
    assert jnp.allclose(loss2, ref2, rtol=1e-5, atol=1e-5), (loss2, ref2)

    print("KERNEL_OK")
</pallas_src>

<mosaic_0001>
module attributes {stable_mosaic.version = 11 : i64} {
  func.func @kernel(%arg0: i32, %arg1: i32, %arg2: memref<2x3x128xf32, #tpu.memory_space<vmem>>, %arg3: memref<2x3x128xf32, #tpu.memory_space<vmem>>, %arg4: memref<8x128xf32, #tpu.memory_space<vmem>>) attributes {dimension_semantics = [#tpu.dimension_semantics<parallel>, #tpu.dimension_semantics<parallel>], iteration_bounds = array<i64: 1, 2>, scalar_prefetch = 0 : i64, scratch_operands = 0 : i64, tpu.core_type = #tpu.core_type<tc>, window_params = [{transform_indices = @transform_0, window_bounds = array<i64: 2, 3, 128>}, {transform_indices = @transform_1, window_bounds = array<i64: 2, 3, 128>}, {transform_indices = @transform_2, window_bounds = array<i64: 8, 128>}]} {
    %c0 = arith.constant 0 : index
    %c0_0 = arith.constant 0 : index
    %c0_1 = arith.constant 0 : index
    %0 = vector.load %arg2[%c0, %c0_0, %c0_1] : memref<2x3x128xf32, #tpu.memory_space<vmem>>, vector<2x1x128xf32>
    %1 = vector.shape_cast %0 : vector<2x1x128xf32> to vector<2x128xf32>
    %c0_2 = arith.constant 0 : index
    %c0_3 = arith.constant 0 : index
    %c0_4 = arith.constant 0 : index
    %2 = vector.load %arg3[%c0_2, %c0_3, %c0_4] : memref<2x3x128xf32, #tpu.memory_space<vmem>>, vector<2x1x128xf32>
    %3 = vector.shape_cast %2 : vector<2x1x128xf32> to vector<2x128xf32>
    %4 = arith.mulf %1, %3 : vector<2x128xf32>
    %c0_5 = arith.constant 0 : index
    %c1 = arith.constant 1 : index
    %c0_6 = arith.constant 0 : index
    %5 = vector.load %arg2[%c0_5, %c1, %c0_6] : memref<2x3x128xf32, #tpu.memory_space<vmem>>, vector<2x1x128xf32>
    %6 = vector.shape_cast %5 : vector<2x1x128xf32> to vector<2x128xf32>
    %c0_7 = arith.constant 0 : index
    %c1_8 = arith.constant 1 : index
    %c0_9 = arith.constant 0 : index
    %7 = vector.load %arg3[%c0_7, %c1_8, %c0_9] : memref<2x3x128xf32, #tpu.memory_space<vmem>>, vector<2x1x128xf32>
    %8 = vector.shape_cast %7 : vector<2x1x128xf32> to vector<2x128xf32>
    %9 = arith.mulf %6, %8 : vector<2x128xf32>
    %10 = arith.addf %4, %9 : vector<2x128xf32>
    %c0_10 = arith.constant 0 : index
    %c2 = arith.constant 2 : index
    %c0_11 = arith.constant 0 : index
    %11 = vector.load %arg2[%c0_10, %c2, %c0_11] : memref<2x3x128xf32, #tpu.memory_space<vmem>>, vector<2x1x128xf32>
    %12 = vector.shape_cast %11 : vector<2x1x128xf32> to vector<2x128xf32>
    %c0_12 = arith.constant 0 : index
    %c2_13 = arith.constant 2 : index
    %c0_14 = arith.constant 0 : index
    %13 = vector.load %arg3[%c0_12, %c2_13, %c0_14] : memref<2x3x128xf32, #tpu.memory_space<vmem>>, vector<2x1x128xf32>
    %14 = vector.shape_cast %13 : vector<2x1x128xf32> to vector<2x128xf32>
    %15 = arith.mulf %12, %14 : vector<2x128xf32>
    %16 = arith.addf %10, %15 : vector<2x128xf32>
    %17 = math.absf %16 : vector<2x128xf32>
    %cst = arith.constant -1.000000e+00 : f32
    %cst_15 = arith.constant 1.000000e+00 : f32
    %18 = vector.broadcast %cst : f32 to vector<2x128xf32>
    %19 = arith.maximumf %18, %17 : vector<2x128xf32>
    %20 = vector.broadcast %cst_15 : f32 to vector<2x128xf32>
    %21 = arith.minimumf %20, %19 : vector<2x128xf32>
    %cst_16 = arith.constant -0.0012624911 : f32
    %22 = vector.broadcast %cst_16 : f32 to vector<2x128xf32>
    %23 = arith.mulf %22, %21 : vector<2x128xf32>
    %cst_17 = arith.constant 6.670090e-03 : f32
    %24 = vector.broadcast %cst_17 : f32 to vector<2x128xf32>
    %25 = arith.addf %23, %24 : vector<2x128xf32>
    %26 = arith.mulf %25, %21 : vector<2x128xf32>
    %cst_18 = arith.constant -0.0170881264 : f32
    %27 = vector.broadcast %cst_18 : f32 to vector<2x128xf32>
    %28 = arith.addf %26, %27 : vector<2x128xf32>
    %29 = arith.mulf %28, %21 : vector<2x128xf32>
    %cst_19 = arith.constant 0.0308918804 : f32
    %30 = vector.broadcast %cst_19 : f32 to vector<2x128xf32>
    %31 = arith.addf %29, %30 : vector<2x128xf32>
    %32 = arith.mulf %31, %21 : vector<2x128xf32>
    %cst_20 = arith.constant -0.0501743034 : f32
    %33 = vector.broadcast %cst_20 : f32 to vector<2x128xf32>
    %34 = arith.addf %32, %33 : vector<2x128xf32>
    %35 = arith.mulf %34, %21 : vector<2x128xf32>
    %cst_21 = arith.constant 0.0889789909 : f32
    %36 = vector.broadcast %cst_21 : f32 to vector<2x128xf32>
    %37 = arith.addf %35, %36 : vector<2x128xf32>
    %38 = arith.mulf %37, %21 : vector<2x128xf32>
    %cst_22 = arith.constant -0.214598805 : f32
    %39 = vector.broadcast %cst_22 : f32 to vector<2x128xf32>
    %40 = arith.addf %38, %39 : vector<2x128xf32>
    %41 = arith.mulf %40, %21 : vector<2x128xf32>
    %cst_23 = arith.constant 1.57079625 : f32
    %42 = vector.broadcast %cst_23 : f32 to vector<2x128xf32>
    %43 = arith.addf %41, %42 : vector<2x128xf32>
    %cst_24 = arith.constant 1.000000e+00 : f32
    %44 = vector.broadcast %cst_24 : f32 to vector<2x128xf32>
    %45 = arith.subf %44, %21 : vector<2x128xf32>
    %cst_25 = arith.constant 0.000000e+00 : f32
    %46 = vector.broadcast %cst_25 : f32 to vector<2x128xf32>
    %47 = arith.maximumf %45, %46 : vector<2x128xf32>
    %48 = math.sqrt %47 : vector<2x128xf32>
    %49 = arith.mulf %48, %43 : vector<2x128xf32>
    %50 = vector.shape_cast %49 : vector<2x128xf32> to vector<1x2x128xf32>
    %cst_26 = arith.constant dense<0.000000e+00> : vector<1xf32>
    %51 = vector.multi_reduction <add>, %50, %cst_26 [1, 2] : vector<1x2x128xf32> to vector<1xf32>
    %52 = vector.shape_cast %51 : vector<1xf32> to vector<1x1x1xf32>
    %53 = vector.extract %52[0, 0, 0] : f32 from vector<1x1x1xf32>
    %54 = tpu.iota {dimensions = array<i32: 0>} : vector<8x128xi32>
    %c0_i32 = arith.constant 0 : i32
    %55 = vector.broadcast %c0_i32 : i32 to vector<8x128xi32>
    %56 = arith.cmpi eq, %54, %55 : vector<8x128xi32>
    %57 = tpu.iota {dimensions = array<i32: 1>} : vector<8x128xi32>
    %c0_i32_27 = arith.constant 0 : i32
    %58 = vector.broadcast %c0_i32_27 : i32 to vector<8x128xi32>
    %59 = arith.cmpi eq, %57, %58 : vector<8x128xi32>
    %60 = arith.andi %56, %59 : vector<8x128xi1>
    %cst_28 = arith.constant 0.000000e+00 : f32
    %61 = vector.broadcast %53 : f32 to vector<8x128xf32>
    %62 = vector.broadcast %cst_28 : f32 to vector<8x128xf32>
    %63 = arith.select %60, %61, %62 : vector<8x128xi1>, vector<8x128xf32>
    %c0_29 = arith.constant 0 : index
    %c0_30 = arith.constant 0 : index
    %64 = vector.load %arg4[%c0_29, %c0_30] : memref<8x128xf32, #tpu.memory_space<vmem>>, vector<8x128xf32>
    tpu.vector_store %arg4[%c0_29, %c0_30], %63 {strides = array<i32>} : memref<8x128xf32, #tpu.memory_space<vmem>>, vector<8x128xf32>,
    return
  }
  func.func @transform_0(%arg0: i32, %arg1: i32) -> (i32, i32, i32) {
    %c0_i32 = arith.constant 0 : i32
    %c0_i32_0 = arith.constant 0 : i32
    return %arg0, %c0_i32, %arg1 : i32, i32, i32
  }
  func.func @transform_1(%arg0: i32, %arg1: i32) -> (i32, i32, i32) {
    %c0_i32 = arith.constant 0 : i32
    %c0_i32_0 = arith.constant 0 : i32
    return %arg0, %c0_i32, %arg1 : i32, i32, i32
  }
  func.func @transform_2(%arg0: i32, %arg1: i32) -> (i32, i32) {
    %c0_i32 = arith.constant 0 : i32
    return %arg0, %arg1 : i32, i32
  }
}

</mosaic_0001>

<llo_original>
// kernel: tpu_custom_call.1
$region0: #{tpu_custom_call.1}
  #allocation0 [shape = 'u32[]', space=smem, size = 0x4, offset = 0x4, fixed_abs, tag = 'smem constant byte address 0x4 - core index']
  #allocation1 [shape = 'u32[144,128]{1,0:T(1,128)}', space=vmem, size = 0x12000, scoped, tag = 'internal scratch']
  %s0 = inlined_call_operand.vmem [shape: f32[2,3,256], index: 0, kind: input, shape index: {}]
  %s1 = inlined_call_operand.vmem [shape: f32[2,3,256], index: 1, kind: input, shape index: {}]
  %s2 = inlined_call_operand.hbm [shape: f32[8,256], index: 2, kind: output, shape index: {}]
  %s3 = sld [smem:[#allocation0]]
  $region123: #{tpu_custom_call.1} parent=0
    _
  %s5 = ssub.s32 1, %s3
  %s6 = scalar_select 0, %s5, %s3
  $region1: #{tpu_custom_call.1} parent=0
    #allocation2 [shape = 'u8[8192]{0}', space=vmem, size = 0x2000, scoped, tag = 'input window, operand 0']
    #allocation3 [shape = 'u8[8192]{0}', space=vmem, size = 0x2000, scoped, tag = 'input window, operand 1']
    #allocation4 [shape = 'u8[8192]{0}', space=vmem, size = 0x2000, scoped, tag = 'output window, operand 0']
    #allocation5 [shape = 's32[2]{0}', space=sflag, size = 0x8, scoped, tag = 'scoped memory for tpu_custom_call.1']
    %7 = vsyncpa [#allocation5], 0
    %s8 = scalar_lea.sflag [#allocation5], 1
    %9 = vsyncpa %s8, 0
    loop: start=0, step=1, limit=4
    $region2: #{tpu_custom_call.1} parent=1 // loop_pre_header
      _
    $region3: #{tpu_custom_call.1} parent=1 // loop_header
      %s11 = sphi 0, %s15
      %p12 = scmp.ge.s32.totalorder %s11, 4
      %s18 = sphi 0, %s30
      %s19 = sphi 0, %s26
      %s20 = sphi 0, %s18
      %s21 = sphi 0, %s19
      %s22 = sphi 0, %s20
      %s23 = sphi 0, %s21
      %s35 = sphi 0, %s37
      %s38 = sphi 0, %s35
      %s39 = sphi 0, %s38
      %s55 = sphi 0, %s39
      %s63 = sphi 0, %s65
      %s66 = sphi 0, %s63
      %s67 = sphi 0, %s66
      %s83 = sphi 0, %s67
      %s91 = sphi 0, %s93
      %s94 = sphi 0, %s91
      %s95 = sphi 0, %s94
      %s111 = sphi 0, %s95
    $region4: #{tpu_custom_call.1} parent=1 // loop_header_branch
      %14 = sbr.rel (%p12) target = $region8
    $region5: #{tpu_custom_call.1} parent=1 // loop_body
      %s16 = ssub.s32 %s11, 1
      %s17 = ssub.s32 %s11, 2
      %s24 = sadd.s32 1, %s19
      %p25 = scmp.ge.s32.totalorder %s24, 2
      %s26 = scalar_select %p25, 0, %s24
      %s27 = sadd.s32 1, %s18
      %s28 = scalar_select %p25, %s27, %s18
      %p29 = scmp.ge.s32.totalorder %s28, 1
      %s30 = scalar_select %p29, 0, %s28
      %s31 = ssub.s32 %s18, %s30
      %s32 = ssub.s32 %s19, %s26
      %s33 = sor.u32 %s31, %s32
      %p34 = scmp.eq.s32.totalorder %s33, 0
      %s36 = sadd.s32 %s35, 1
      %s37 = scalar_select %p34, %s35, %s36
      %p40 = pneg %p34
      %p41 = scmp.eq.s32.totalorder %s11, 1
      %p42 = por %p40, %p41
      %p43 = scmp.ne.s32.totalorder %s35, %s38
      %p44 = scmp.eq.s32.totalorder %s11, 0
      %p45 = por %p43, %p44
      %p46 = scmp.ne.s32.totalorder %s35, %s38
      %p47 = scmp.eq.s32.totalorder %s16, 1
      %p48 = por %p46, %p47
      %p49 = scmp.ne.s32.totalorder %s38, %s39
      %p50 = scmp.eq.s32.totalorder %s16, 0
      %p51 = por %p49, %p50
      %p52 = scmp.ne.s32.totalorder %s38, %s39
      %p53 = scmp.eq.s32.totalorder %s17, 1
      %p54 = por %p52, %p53
      %p56 = scmp.ne.s32.totalorder %s39, %s55
      %p57 = scmp.eq.s32.totalorder %s17, 0
      %p58 = por %p56, %p57
      %s59 = ssub.s32 %s18, %s30
      %s60 = ssub.s32 %s19, %s26
      %s61 = sor.u32 %s59, %s60
      %p62 = scmp.eq.s32.totalorder %s61, 0
      %s64 = sadd.s32 %s63, 1
      %s65 = scalar_select %p62, %s63, %s64
      %p68 = pneg %p62
      %p69 = scmp.eq.s32.totalorder %s11, 1
      %p70 = por %p68, %p69
      %p71 = scmp.ne.s32.totalorder %s63, %s66
      %p72 = scmp.eq.s32.totalorder %s11, 0
      %p73 = por %p71, %p72
      %p74 = scmp.ne.s32.totalorder %s63, %s66
      %p75 = scmp.eq.s32.totalorder %s16, 1
      %p76 = por %p74, %p75
      %p77 = scmp.ne.s32.totalorder %s66, %s67
      %p78 = scmp.eq.s32.totalorder %s16, 0
      %p79 = por %p77, %p78
      %p80 = scmp.ne.s32.totalorder %s66, %s67
      %p81 = scmp.eq.s32.totalorder %s17, 1
      %p82 = por %p80, %p81
      %p84 = scmp.ne.s32.totalorder %s67, %s83
      %p85 = scmp.eq.s32.totalorder %s17, 0
      %p86 = por %p84, %p85
      %s87 = ssub.s32 %s18, %s30
      %s88 = ssub.s32 %s19, %s26
      %s89 = sor.u32 %s87, %s88
      %p90 = scmp.eq.s32.totalorder %s89, 0
      %s92 = sadd.s32 %s91, 1
      %s93 = scalar_select %p90, %s91, %s92
      %p96 = pneg %p90
      %p97 = scmp.eq.s32.totalorder %s11, 1
      %p98 = por %p96, %p97
      %p99 = scmp.ne.s32.totalorder %s91, %s94
      %p100 = scmp.eq.s32.totalorder %s11, 0
      %p101 = por %p99, %p100
      %p102 = scmp.ne.s32.totalorder %s91, %s94
      %p103 = scmp.eq.s32.totalorder %s16, 1
      %p104 = por %p102, %p103
      %p105 = scmp.ne.s32.totalorder %s94, %s95
      %p106 = scmp.eq.s32.totalorder %s16, 0
      %p107 = por %p105, %p106
      %p108 = scmp.ne.s32.totalorder %s94, %s95
      %p109 = scmp.eq.s32.totalorder %s17, 1
      %p110 = por %p108, %p109
      %p112 = scmp.ne.s32.totalorder %s95, %s111
      %p113 = scmp.eq.s32.totalorder %s17, 0
      %p114 = por %p112, %p113
      %p115 = scmp.le.s32.totalorder 1, %s11
      %p116 = scmp.lt.s32.totalorder %s11, 3
      %p117 = pnand %p115, %p116
      %p118 = pneg %p117
      // Predicated region
      $region9: #{tpu_custom_call.1} parent=5 // pred_check
        _
      $region10: #{tpu_custom_call.1} parent=5 // pred_check_branch
        %120 = sbr.rel (%p117) target = $region12
      $region11: #{tpu_custom_call.1} parent=5 // pred_region
        %s121 = ssub.s32 %s11, 1
      $region12: #{tpu_custom_call.1} parent=5 // pred_fallthru
        _
      %p122 = scmp.lt.s32.totalorder %s11, 2
      // Predicated region
      $region13: #{tpu_custom_call.1} parent=5 // pred_check
        %p123 = pneg %p122
      $region14: #{tpu_custom_call.1} parent=5 // pred_check_branch
        %125 = sbr.rel (%p123) target = $region16
      $region15: #{tpu_custom_call.1} parent=5 // pred_region
        // Predicated region
        $region17: #{tpu_custom_call.1} parent=15 // pred_check
          %p126 = pneg %p45
        $region18: #{tpu_custom_call.1} parent=15 // pred_check_branch
          %128 = sbr.rel (%p126) target = $region20
        $region19: #{tpu_custom_call.1} parent=15 // pred_region
          %s129 = sand.u32 %s35, 1
          %s130 = sand.u32 %s35, 1
          %s131 = smul.addr %s130, 8
          %s132 = scalar_lea.vmem [#allocation2], %s131
          %s133 = smul.u32 2, %s18
          %s134 = smul.addr %s133, 2
          %s135 = sadd.s32 %s19, %s134
          %s136 = smul.addr %s135, 4
          %s137 = scalar_lea.vmem %s0, %s136
          // Predicated region
          $region21: #{tpu_custom_call.1} parent=19 // pred_check
            _
          $region22: #{tpu_custom_call.1} parent=19 // pred_check_branch
            %139 = sbr.rel (0) target = $region24
          $region23: #{tpu_custom_call.1} parent=19 // pred_region
            // Predicated region
            $region25: #{tpu_custom_call.1} parent=23 // pred_check
              _
            $region26: #{tpu_custom_call.1} parent=23 // pred_check_branch
              %141 = sbr.rel target = $region28
            $region27: #{tpu_custom_call.1} parent=23 // pred_region
              // Predicated region
              $region40: #{tpu_custom_call.1} parent=27 // pred_check
                _
              $region41: #{tpu_custom_call.1} parent=27 // pred_check_branch
                %159 = sbr.rel (0) target = $region43
              $region42: #{tpu_custom_call.1} parent=27 // pred_region
                loop: start=0, step=1, limit=1
                $region44: #{tpu_custom_call.1} parent=42 // loop_pre_header
                  _
                $region45: #{tpu_custom_call.1} parent=42 // loop_header
                  %s161 = sphi 0, %s165
                  %p162 = scmp.ge.s32.totalorder %s161, 1
                  %s166 = sphi %s137, %s137
                  %s167 = sphi %s132, %s132
                $region46: #{tpu_custom_call.1} parent=42 // loop_header_branch
                  %164 = sbr.rel (%p162) target = $region50
                $region47: #{tpu_custom_call.1} parent=42 // loop_body
                  _
                $region48: #{tpu_custom_call.1} parent=42 // loop_footer
                  %s165 = sadd.s32 1, %s161
                $region49: #{tpu_custom_call.1} parent=42 // loop_footer_branch
                  %160 = sbr.rel target = $region45
                $region50: #{tpu_custom_call.1} parent=42 // loop_exit
                  _
                %s169 = ssub.s32 16, 1
                loop: start=0, step=1, limit=1
                $region51: #{tpu_custom_call.1} parent=42 // loop_pre_header
                  _
                $region52: #{tpu_custom_call.1} parent=42 // loop_header
                  %s171 = sphi 0, %s175
                  %p172 = scmp.ge.s32.totalorder %s171, 1
                  %s176 = sphi %s137, %s137
                  %s177 = sphi %s132, %s132
                $region53: #{tpu_custom_call.1} parent=42 // loop_header_branch
                  %174 = sbr.rel (%p172) target = $region57
                $region54: #{tpu_custom_call.1} parent=42 // loop_body
                  %v178 = vld [vmem:[%s176] sm:%s169]
                  %179 = vst [vmem:[%s177] sm:%s169] %v178
                  %v180 = vld [vmem:[%s176 + $0x8] sm:%s169]
                  %181 = vst [vmem:[%s177 + $0x4] sm:%s169] %v180
                $region55: #{tpu_custom_call.1} parent=42 // loop_footer
                  %s175 = sadd.s32 1, %s171
                $region56: #{tpu_custom_call.1} parent=42 // loop_footer_branch
                  %170 = sbr.rel target = $region52
                $region57: #{tpu_custom_call.1} parent=42 // loop_exit
                  _
              $region43: #{tpu_custom_call.1} parent=27 // pred_fallthru
                _
            $region28: #{tpu_custom_call.1} parent=23 // pred_fallthru
              _
            // Predicated region
            $region29: #{tpu_custom_call.1} parent=23 // pred_check
              _
            $region30: #{tpu_custom_call.1} parent=23 // pred_check_branch
              %143 = sbr.rel (0) target = $region32
            $region31: #{tpu_custom_call.1} parent=23 // pred_region
              %s145 = ssub.s32 16, 1
              loop: start=0, step=1, limit=1
              $region33: #{tpu_custom_call.1} parent=31 // loop_pre_header
                _
              $region34: #{tpu_custom_call.1} parent=31 // loop_header
                %s147 = sphi 0, %s151
                %p148 = scmp.ge.s32.totalorder %s147, 1
                %s152 = sphi %s137, %s137
                %s153 = sphi %s132, %s132
              $region35: #{tpu_custom_call.1} parent=31 // loop_header_branch
                %150 = sbr.rel (%p148) target = $region39
              $region36: #{tpu_custom_call.1} parent=31 // loop_body
                %v154 = vld [vmem:[%s152] sm:%s145]
                %155 = vst [vmem:[%s153] sm:%s145] %v154
                %v156 = vld [vmem:[%s152 + $0x8] sm:%s145]
                %157 = vst [vmem:[%s153 + $0x4] sm:%s145] %v156
              $region37: #{tpu_custom_call.1} parent=31 // loop_footer
                %s151 = sadd.s32 1, %s147
              $region38: #{tpu_custom_call.1} parent=31 // loop_footer_branch
                %146 = sbr.rel target = $region34
              $region39: #{tpu_custom_call.1} parent=31 // loop_exit
                _
            $region32: #{tpu_custom_call.1} parent=23 // pred_fallthru
              _
          $region24: #{tpu_custom_call.1} parent=19 // pred_fallthru
            _
          %182 = vnop
        $region20: #{tpu_custom_call.1} parent=15 // pred_fallthru
          _
        // Predicated region
        $region58: #{tpu_custom_call.1} parent=15 // pred_check
          %p183 = pneg %p73
        $region59: #{tpu_custom_call.1} parent=15 // pred_check_branch
          %185 = sbr.rel (%p183) target = $region61
        $region60: #{tpu_custom_call.1} parent=15 // pred_region
          %s186 = sand.u32 %s63, 1
          %s187 = sand.u32 %s63, 1
          %s188 = smul.addr %s187, 8
          %s189 = scalar_lea.vmem [#allocation3], %s188
          %s190 = smul.u32 2, %s18
          %s191 = smul.addr %s190, 2
          %s192 = sadd.s32 %s19, %s191
          %s193 = smul.addr %s192, 4
          %s194 = scalar_lea.vmem %s1, %s193
          // Predicated region
          $region62: #{tpu_custom_call.1} parent=60 // pred_check
            _
          $region63: #{tpu_custom_call.1} parent=60 // pred_check_branch
            %196 = sbr.rel (0) target = $region65
          $region64: #{tpu_custom_call.1} parent=60 // pred_region
            // Predicated region
            $region66: #{tpu_custom_call.1} parent=64 // pred_check
              _
            $region67: #{tpu_custom_call.1} parent=64 // pred_check_branch
              %198 = sbr.rel target = $region69
            $region68: #{tpu_custom_call.1} parent=64 // pred_region
              // Predicated region
              $region81: #{tpu_custom_call.1} parent=68 // pred_check
                _
              $region82: #{tpu_custom_call.1} parent=68 // pred_check_branch
                %216 = sbr.rel (0) target = $region84
              $region83: #{tpu_custom_call.1} parent=68 // pred_region
                loop: start=0, step=1, limit=1
                $region85: #{tpu_custom_call.1} parent=83 // loop_pre_header
                  _
                $region86: #{tpu_custom_call.1} parent=83 // loop_header
                  %s218 = sphi 0, %s222
                  %p219 = scmp.ge.s32.totalorder %s218, 1
                  %s223 = sphi %s194, %s194
                  %s224 = sphi %s189, %s189
                $region87: #{tpu_custom_call.1} parent=83 // loop_header_branch
                  %221 = sbr.rel (%p219) target = $region91
                $region88: #{tpu_custom_call.1} parent=83 // loop_body
                  _
                $region89: #{tpu_custom_call.1} parent=83 // loop_footer
                  %s222 = sadd.s32 1, %s218
                $region90: #{tpu_custom_call.1} parent=83 // loop_footer_branch
                  %217 = sbr.rel target = $region86
                $region91: #{tpu_custom_call.1} parent=83 // loop_exit
                  _
                %s226 = ssub.s32 16, 1
                loop: start=0, step=1, limit=1
                $region92: #{tpu_custom_call.1} parent=83 // loop_pre_header
                  _
                $region93: #{tpu_custom_call.1} parent=83 // loop_header
                  %s228 = sphi 0, %s232
                  %p229 = scmp.ge.s32.totalorder %s228, 1
                  %s233 = sphi %s194, %s194
                  %s234 = sphi %s189, %s189
                $region94: #{tpu_custom_call.1} parent=83 // loop_header_branch
                  %231 = sbr.rel (%p229) target = $region98
                $region95: #{tpu_custom_call.1} parent=83 // loop_body
                  %v235 = vld [vmem:[%s233] sm:%s226]
                  %236 = vst [vmem:[%s234] sm:%s226] %v235
                  %v237 = vld [vmem:[%s233 + $0x8] sm:%s226]
                  %238 = vst [vmem:[%s234 + $0x4] sm:%s226] %v237
                $region96: #{tpu_custom_call.1} parent=83 // loop_footer
                  %s232 = sadd.s32 1, %s228
                $region97: #{tpu_custom_call.1} parent=83 // loop_footer_branch
                  %227 = sbr.rel target = $region93
                $region98: #{tpu_custom_call.1} parent=83 // loop_exit
                  _
              $region84: #{tpu_custom_call.1} parent=68 // pred_fallthru
                _
            $region69: #{tpu_custom_call.1} parent=64 // pred_fallthru
              _
            // Predicated region
            $region70: #{tpu_custom_call.1} parent=64 // pred_check
              _
            $region71: #{tpu_custom_call.1} parent=64 // pred_check_branch
              %200 = sbr.rel (0) target = $region73
            $region72: #{tpu_custom_call.1} parent=64 // pred_region
              %s202 = ssub.s32 16, 1
              loop: start=0, step=1, limit=1
              $region74: #{tpu_custom_call.1} parent=72 // loop_pre_header
                _
              $region75: #{tpu_custom_call.1} parent=72 // loop_header
                %s204 = sphi 0, %s208
                %p205 = scmp.ge.s32.totalorder %s204, 1
                %s209 = sphi %s194, %s194
                %s210 = sphi %s189, %s189
              $region76: #{tpu_custom_call.1} parent=72 // loop_header_branch
                %207 = sbr.rel (%p205) target = $region80
              $region77: #{tpu_custom_call.1} parent=72 // loop_body
                %v211 = vld [vmem:[%s209] sm:%s202]
                %212 = vst [vmem:[%s210] sm:%s202] %v211
                %v213 = vld [vmem:[%s209 + $0x8] sm:%s202]
                %214 = vst [vmem:[%s210 + $0x4] sm:%s202] %v213
              $region78: #{tpu_custom_call.1} parent=72 // loop_footer
                %s208 = sadd.s32 1, %s204
              $region79: #{tpu_custom_call.1} parent=72 // loop_footer_branch
                %203 = sbr.rel target = $region75
              $region80: #{tpu_custom_call.1} parent=72 // loop_exit
                _
            $region73: #{tpu_custom_call.1} parent=64 // pred_fallthru
              _
          $region65: #{tpu_custom_call.1} parent=60 // pred_fallthru
            _
          %239 = vnop
        $region61: #{tpu_custom_call.1} parent=15 // pred_fallthru
          _
      $region16: #{tpu_custom_call.1} parent=5 // pred_fallthru
        _
      %p240 = scmp.le.s32.totalorder 1, %s11
      %p241 = scmp.lt.s32.totalorder %s11, 3
      %p242 = pnand %p240, %p241
      %p243 = pneg %p242
      // Predicated region
      $region99: #{tpu_custom_call.1} parent=5 // pred_check
        _
      $region100: #{tpu_custom_call.1} parent=5 // pred_check_branch
        %245 = sbr.rel (%p242) target = $region102
      $region101: #{tpu_custom_call.1} parent=5 // pred_region
        %s246 = ssub.s32 %s11, 1
        %s247 = sand.u32 %s38, 1
        %s248 = sand.u32 %s38, 1
        %s249 = smul.addr %s248, 8
        %s250 = scalar_lea.vmem [#allocation2], %s249
        // Predicated region
        $region103: #{tpu_custom_call.1} parent=101 // pred_check
          %p251 = pneg %p51
        $region104: #{tpu_custom_call.1} parent=101 // pred_check_branch
          %253 = sbr.rel (%p251) target = $region106
        $region105: #{tpu_custom_call.1} parent=101 // pred_region
          _
        $region106: #{tpu_custom_call.1} parent=101 // pred_fallthru
          _
        %s254 = sand.u32 %s66, 1
        %s255 = sand.u32 %s66, 1
        %s256 = smul.addr %s255, 8
        %s257 = scalar_lea.vmem [#allocation3], %s256
        // Predicated region
        $region107: #{tpu_custom_call.1} parent=101 // pred_check
          %p258 = pneg %p79
        $region108: #{tpu_custom_call.1} parent=101 // pred_check_branch
          %260 = sbr.rel (%p258) target = $region110
        $region109: #{tpu_custom_call.1} parent=101 // pred_region
          _
        $region110: #{tpu_custom_call.1} parent=101 // pred_fallthru
          _
        %s261 = sand.u32 %s38, 1
        %s262 = sand.u32 %s38, 1
        %s263 = smul.addr %s262, 8
        %s264 = scalar_lea.vmem [#allocation2], %s263
        %p265 = pneg %p51
        %p266 = pneg %p48
        %s267 = sand.u32 %s66, 1
        %s268 = sand.u32 %s66, 1
        %s269 = smul.addr %s268, 8
        %s270 = scalar_lea.vmem [#allocation3], %s269
        %p271 = pneg %p79
        %p272 = pneg %p76
        %p273 = pneg %p107
        %p274 = pneg %p104
        %s275 = sand.u32 %s94, 1
        %s276 = scalar_lea.sflag [#allocation5], %s275
        %s277 = sand.u32 %s94, 1
        %s278 = smul.addr %s277, 8
        %s279 = scalar_lea.vmem [#allocation4], %s278
        %s280 = smul.u32 2, %s20
        %s281 = smul.u32 2, %s20
        %v282 = vld [vmem:[%s250] sm:$0x1]
        %v283 = vld [vmem:[%s250 + $0x4] sm:$0x1]
        %v284 = vld [vmem:[%s257] sm:$0x1]
        %v285 = vld [vmem:[%s257 + $0x4] sm:$0x1]
        %v286 = vmul.f32 %v282, %v284
        %v287 = vmul.f32 %v283, %v285
        %v288 = vld [vmem:[%s250 + $0x1] sm:$0x1]
        %v289 = vld [vmem:[%s250 + $0x5] sm:$0x1]
        %v290 = vld [vmem:[%s257 + $0x1] sm:$0x1]
        %v291 = vld [vmem:[%s257 + $0x5] sm:$0x1]
        %v292 = vmul.f32 %v288, %v290
        %v293 = vmul.f32 %v289, %v291
        %v294 = vadd.f32 %v286, %v292
        %v295 = vadd.f32 %v287, %v293
        %v296 = vld [vmem:[%s250 + $0x2] sm:$0x1]
        %v297 = vld [vmem:[%s250 + $0x6] sm:$0x1]
        %v298 = vld [vmem:[%s257 + $0x2] sm:$0x1]
        %v299 = vld [vmem:[%s257 + $0x6] sm:$0x1]
        %v300 = vmul.f32 %v296, %v298
        %v301 = vmul.f32 %v297, %v299
        %v302 = vadd.f32 %v294, %v300
        %v303 = vadd.f32 %v295, %v301
        %v304 = vand.u32 2147483647, %v302
        %v305 = vand.u32 2147483647, %v303
        %v306 = vmax.f32 %v304, -1.0
        %v307 = vmax.f32 %v305, -1.0
        %v308 = vmin.f32 %v306, 1.0
        %v309 = vmin.f32 %v307, 1.0
        %v310 = vmul.f32 %v308, -0.0012624911
        %v311 = vmul.f32 %v309, -0.0012624911
        %v312 = vadd.f32 %v310, 0.00667009
        %v313 = vadd.f32 %v311, 0.00667009
        %v314 = vmul.f32 %v312, %v308
        %v315 = vmul.f32 %v313, %v309
        %v316 = vadd.f32 %v314, -0.017088126
        %v317 = vadd.f32 %v315, -0.017088126
        %v318 = vmul.f32 %v316, %v308
        %v319 = vmul.f32 %v317, %v309
        %v320 = vadd.f32 %v318, 0.03089188
        %v321 = vadd.f32 %v319, 0.03089188
        %v322 = vmul.f32 %v320, %v308
        %v323 = vmul.f32 %v321, %v309
        %v324 = vadd.f32 %v322, -0.050174303
        %v325 = vadd.f32 %v323, -0.050174303
        %v326 = vmul.f32 %v324, %v308
        %v327 = vmul.f32 %v325, %v309
        %v328 = vadd.f32 %v326, 0.08897899
        %v329 = vadd.f32 %v327, 0.08897899
        %v330 = vmul.f32 %v328, %v308
        %v331 = vmul.f32 %v329, %v309
        %v332 = vadd.f32 %v330, -0.2145988
        %v333 = vadd.f32 %v331, -0.2145988
        %v334 = vmul.f32 %v332, %v308
        %v335 = vmul.f32 %v333, %v309
        %v336 = vadd.f32 %v334, 1.5707963
        %v337 = vadd.f32 %v335, 1.5707963
        %v338 = vsub.f32 1.0, %v308
        %v339 = vsub.f32 1.0, %v309
        %v340 = vmax.f32 %v338, 0.0
        %v341 = vmax.f32 %v339, 0.0
        %v342 = vrsqrt.pop %v340
        %v343 = vmul.f32 %v340, %v342
        %vm344 = vcmp.eq.f32.partialorder %v340, inf
        %v345 = vsel %vm344, %v340, %v343
        %vm346 = vcmp.eq.f32.partialorder %v340, 0.0
        %v347 = vand.u32 %v340, 2147483648
        %v348 = vsel %vm346, %v347, %v345
        %v349 = vrsqrt.pop %v341
        %v350 = vmul.f32 %v341, %v349
        %vm351 = vcmp.eq.f32.partialorder %v341, inf
        %v352 = vsel %vm351, %v341, %v350
        %vm353 = vcmp.eq.f32.partialorder %v341, 0.0
        %v354 = vand.u32 %v341, 2147483648
        %v355 = vsel %vm353, %v354, %v352
        %v356 = vmul.f32 %v348, %v336
        %v357 = vmul.f32 %v355, %v337
        %v360 = vrot.slane %v357, 7
        %vm361 = vcmask 1041409
        %v362 = vsel %vm361, %v360, %v356
        %vm364 = vcmask 1041408
        %v365 = vsel %vm364, %v362, 0.0
        %366 = vadd.xlane.f32.xlu0 %v365
        %v367 = vpop.xlane.xlu0 %366
        %v368 = vrot.slane %v367, 4
        %v369 = vadd.f32 %v367, %v368
        %v370 = vrot.slane %v369, 2
        %v371 = vadd.f32 %v369, %v370
        %v372 = vrot.slane %v371, 1
        %v373 = vadd.f32 %v371, %v372
        %s374 = vtos %v373
        %v375 = vlaneseq
        %v376 = vshrl.u32 %v375, 7
        %vm377 = vcmp.eq.s32.totalorder %v376, 0
        %v378 = vlaneseq
        %v379 = vand.u32 %v378, 127
        %vm380 = vcmp.eq.s32.totalorder %v379, 0
        %vm381 = vmand %vm377, %vm380
        %v382 = vstv %s374
        %v383 = vsel %vm381, %v382, 0.0
        %384 = vst [vmem:[%s279] sm:$0xff] %v383
        %s385 = sand.u32 %s94, 1
        %s386 = scalar_lea.sflag [#allocation5], %s385
        %s387 = sand.u32 %s94, 1
        %s388 = smul.addr %s387, 8
        %s389 = scalar_lea.vmem [#allocation4], %s388
        // Predicated region
        $region111: #{tpu_custom_call.1} parent=101 // pred_check
          %p390 = pneg %p104
        $region112: #{tpu_custom_call.1} parent=101 // pred_check_branch
          %392 = sbr.rel (%p390) target = $region114
        $region113: #{tpu_custom_call.1} parent=101 // pred_region
          %s394 = ssub.s32 128, 128
          %395 = vsyncadd %s386, %s394
          %s396 = smul.addr %s20, 2
          %s397 = sadd.s32 %s21, %s396
          %s398 = smul.addr %s397, 128
          %s399 = scalar_lea.hbm %s2, %s398
          %s401 = sshll.u32 %s389, 4
          %s402 = int_to_ptr.vmem [resolvable:$true] %s401
          %404 = dma.vmem_to_hbm [thread:$0]  %s402, 128, %s399, %s386
        $region114: #{tpu_custom_call.1} parent=101 // pred_fallthru
          _
      $region102: #{tpu_custom_call.1} parent=5 // pred_fallthru
        _
      %p405 = scmp.le.s32.totalorder 2, %s11
      // Predicated region
      $region115: #{tpu_custom_call.1} parent=5 // pred_check
        %p406 = pneg %p405
      $region116: #{tpu_custom_call.1} parent=5 // pred_check_branch
        %408 = sbr.rel (%p406) target = $region118
      $region117: #{tpu_custom_call.1} parent=5 // pred_region
        %s409 = ssub.s32 %s11, 2
        // Predicated region
        $region119: #{tpu_custom_call.1} parent=117 // pred_check
          %p410 = pneg %p110
        $region120: #{tpu_custom_call.1} parent=117 // pred_check_branch
          %412 = sbr.rel (%p410) target = $region122
        $region121: #{tpu_custom_call.1} parent=117 // pred_region
          %s413 = sand.u32 %s95, 1
          %s414 = scalar_lea.sflag [#allocation5], %s413
          %s415 = sand.u32 %s95, 1
          %s416 = smul.addr %s415, 8
          %s417 = scalar_lea.vmem [#allocation4], %s416
          %418 = dma.done %s414, 128
        $region122: #{tpu_custom_call.1} parent=117 // pred_fallthru
          _
      $region118: #{tpu_custom_call.1} parent=5 // pred_fallthru
        _
    $region6: #{tpu_custom_call.1} parent=1 // loop_footer
      %s15 = sadd.s32 1, %s11
    $region7: #{tpu_custom_call.1} parent=1 // loop_footer_branch
      %10 = sbr.rel target = $region3
    $region8: #{tpu_custom_call.1} parent=1 // loop_exit
      _
    %419 = vsyncpa [#allocation5], 1
    %s420 = scalar_lea.sflag [#allocation5], 1
    %421 = vsyncpa %s420, 1

</llo_original>
